<compile_context>
chip_gen: v7x
topology: tpu7x:2x2x1
jax: 0.10.0
libtpu: 0.0.40
codegen_flags: <defaults>
</compile_context>

<pallas_src>
import jax
import jax.numpy as jnp
from jax.experimental import pallas as pl
from jax.experimental.pallas import tpu as pltpu

_SQRT_HALF = 0.7071067811865476


def _erf(x):
    # Abramowitz & Stegun 7.1.26 rational polynomial, |abs err| <= 1.5e-7.
    # The divide is replaced by an EUP approx reciprocal + one Newton
    # refinement (back to ~f32 accuracy, far cheaper than a VALU divide).
    a1, a2, a3, a4, a5 = (0.254829592, -0.284496736, 1.421413741,
                          -1.453152027, 1.061405429)
    p = 0.3275911
    ax = jnp.abs(x)
    d = 1.0 + p * ax
    t = pl.reciprocal(d, approx=True)
    t = t * (2.0 - d * t)                      # Newton step: restores precision
    poly = ((((a5 * t + a4) * t + a3) * t + a2) * t + a1) * t
    y = 1.0 - poly * jnp.exp(-ax * ax)
    return jnp.where(x < 0.0, -y, y)


def _gelu_exact(x):
    # Matches PyTorch nn.GELU() default (erf-based, NOT the tanh approximation).
    return 0.5 * x * (1.0 + _erf(x * _SQRT_HALF))


def _adapter_kernel(x_ref, w1_ref, b1_ref, w2_ref, b2_ref, o_ref):
    """One (tile_rows, D) slab: out = x + GELU(GELU(x@W1 + b1)@W2 + b2)."""
    x = x_ref[...]                                                   # (tm, D) native dtype
    x_f32 = x.astype(jnp.float32)
    # First Linear: MXU matmul in the streaming dtype, f32 accumulation.
    h = jnp.dot(x, w1_ref[...], preferred_element_type=jnp.float32)  # (tm, Hb)
    h = _gelu_exact(h + b1_ref[...])
    # Second Linear: cast the (tiny) hidden back to the weight dtype for the MXU.
    p = jnp.dot(h.astype(w2_ref.dtype), w2_ref[...],
                preferred_element_type=jnp.float32)                  # (tm, D)
    p = _gelu_exact(p + b2_ref[...])
    # Residual + single lane-dense store in the input dtype.
    o_ref[...] = (x_f32 + p).astype(o_ref.dtype)


def adapter_prompt(x, params, *, tile_rows=None):
    """x: (..., D) array. params in PyTorch Linear shapes:
       w1 (32, D), b1 (32,), w2 (D, 32), b2 (D,).
    Returns x + prompt_learn(x) (the `promped` tensor of Adapter.forward),
    in the same dtype as x."""
    orig_shape = x.shape
    D = orig_shape[-1]
    Hb = params["w1"].shape[0]                       # bottleneck width (32)
    x2 = x.reshape(-1, D)                            # native dtype, no copy
    rows = x2.shape[0]
    dt = x2.dtype

    if tile_rows is None:
        # Small inputs: one block (legal: block dim == full array dim).
        # Large inputs: 512-row tiles (~85% of HBM roofline; double-buffered
        # f32 in+out blocks stay inside v5e's 16 MiB default scoped VMEM;
        # bf16 streaming halves that again).
        tile_rows = rows if rows <= 1024 else 512
    tile_rows = min(tile_rows, rows)
    grid = (pl.cdiv(rows, tile_rows),)               # partial last block is masked

    # Parameter layout plumbing stays in the wrapper (tiny, grid-resident).
    w1 = jnp.transpose(params["w1"]).astype(dt)            # (D, Hb)
    w2 = jnp.transpose(params["w2"]).astype(dt)            # (Hb, D)
    b1 = params["b1"].reshape(1, Hb).astype(jnp.float32)
    b2 = params["b2"].reshape(1, D).astype(jnp.float32)

    out = pl.pallas_call(
        _adapter_kernel,
        out_shape=jax.ShapeDtypeStruct((rows, D), dt),
        grid=grid,
        in_specs=[
            pl.BlockSpec((tile_rows, D), lambda i: (i, 0)),   # activations stream
            pl.BlockSpec((D, Hb), lambda i: (0, 0)),          # weights resident
            pl.BlockSpec((1, Hb), lambda i: (0, 0)),
            pl.BlockSpec((Hb, D), lambda i: (0, 0)),
            pl.BlockSpec((1, D), lambda i: (0, 0)),
        ],
        out_specs=pl.BlockSpec((tile_rows, D), lambda i: (i, 0)),
        compiler_params=pltpu.CompilerParams(
            dimension_semantics=("parallel",)),               # megacore on v7x
    )(x2, w1, b1, w2, b2)

    return out.reshape(orig_shape)


def reference(x, params):
    """Pure-JAX f32 reference following the PyTorch forward literally."""
    x = x.astype(jnp.float32)
    w1 = params["w1"].astype(jnp.float32)
    w2 = params["w2"].astype(jnp.float32)
    b1 = params["b1"].astype(jnp.float32)
    b2 = params["b2"].astype(jnp.float32)
    h = jax.nn.gelu(x @ w1.T + b1, approximate=False)
    p = jax.nn.gelu(h @ w2.T + b2, approximate=False)
    return x + p


if __name__ == "__main__":
    key = jax.random.PRNGKey(0)
    # dim = blk.attn.qkv.in_features (768 in SAM ViT-B); a small lane-aligned
    # stand-in of 128 is used here.  Bottleneck hidden width is fixed at 32.
    B, N, D, Hb = 2, 8, 128, 32
    ks = jax.random.split(key, 6)
    x = jax.random.normal(ks[0], (B, N, D), jnp.float32)

    params = {
        "w1": 0.1 * jax.random.normal(ks[1], (Hb, D), jnp.float32),
        "b1": 0.1 * jax.random.normal(ks[2], (Hb,), jnp.float32),
        "w2": 0.1 * jax.random.normal(ks[3], (D, Hb), jnp.float32),
        "b2": 0.1 * jax.random.normal(ks[4], (D,), jnp.float32),
    }

    # 1) f32 path, single block (rows <= 1024).
    out = jax.block_until_ready(adapter_prompt(x, params))
    ref = reference(x, params)
    assert out.shape == x.shape and out.dtype == x.dtype
    if not bool(jnp.allclose(out, ref, atol=1e-4, rtol=1e-4)):
        raise AssertionError(
            f"f32 mismatch vs reference, max abs err = "
            f"{float(jnp.max(jnp.abs(out - ref)))}")

    # 2) Multi-block path with a PARTIAL last block (no wrapper-side padding):
    #    12 rows, tile_rows=8 -> grid=2, last block masked.
    x_odd = jax.random.normal(ks[5], (1, 12, D), jnp.float32)
    out_odd = jax.block_until_ready(adapter_prompt(x_odd, params, tile_rows=8))
    ref_odd = reference(x_odd, params)
    if not bool(jnp.allclose(out_odd, ref_odd, atol=1e-4, rtol=1e-4)):
        raise AssertionError(
            f"partial-block mismatch, max abs err = "
            f"{float(jnp.max(jnp.abs(out_odd - ref_odd)))}")

    # 3) bf16 streaming path (native-dtype in/out, bf16 MXU, f32 math inside).
    x_bf16 = x.astype(jnp.bfloat16)
    out_bf16 = jax.block_until_ready(adapter_prompt(x_bf16, params))
    assert out_bf16.dtype == jnp.bfloat16 and out_bf16.shape == x.shape
    ref_bf16 = reference(x_bf16, params)
    if not bool(jnp.allclose(out_bf16.astype(jnp.float32), ref_bf16,
                             atol=1e-1, rtol=1e-1)):
        raise AssertionError(
            f"bf16 mismatch vs reference, max abs err = "
            f"{float(jnp.max(jnp.abs(out_bf16.astype(jnp.float32) - ref_bf16)))}")

    print("KERNEL_OK")
</pallas_src>

<mosaic_0001>
module attributes {stable_mosaic.version = 11 : i64} {
  func.func @_adapter_kernel(%arg0: i32, %arg1: memref<16x128xf32, #tpu.memory_space<vmem>>, %arg2: memref<128x32xf32, #tpu.memory_space<vmem>>, %arg3: memref<1x32xf32, #tpu.memory_space<vmem>>, %arg4: memref<32x128xf32, #tpu.memory_space<vmem>>, %arg5: memref<1x128xf32, #tpu.memory_space<vmem>>, %arg6: memref<16x128xf32, #tpu.memory_space<vmem>>) attributes {dimension_semantics = [#tpu.dimension_semantics<parallel>], iteration_bounds = array<i64: 1>, scalar_prefetch = 0 : i64, scratch_operands = 0 : i64, tpu.core_type = #tpu.core_type<tc>, window_params = [{transform_indices = @transform_0, window_bounds = array<i64: 16, 128>}, {pipeline_mode = #tpu.pipeline_mode<synchronous>, transform_indices = @transform_1, window_bounds = array<i64: 128, 32>}, {pipeline_mode = #tpu.pipeline_mode<synchronous>, transform_indices = @transform_2, window_bounds = array<i64: 1, 32>}, {pipeline_mode = #tpu.pipeline_mode<synchronous>, transform_indices = @transform_3, window_bounds = array<i64: 32, 128>}, {pipeline_mode = #tpu.pipeline_mode<synchronous>, transform_indices = @transform_4, window_bounds = array<i64: 1, 128>}, {transform_indices = @transform_5, window_bounds = array<i64: 16, 128>}]} {
    %c0 = arith.constant 0 : index
    %c0_0 = arith.constant 0 : index
    %0 = vector.load %arg1[%c0, %c0_0] : memref<16x128xf32, #tpu.memory_space<vmem>>, vector<16x128xf32>
    %c0_1 = arith.constant 0 : index
    %c0_2 = arith.constant 0 : index
    %1 = vector.load %arg2[%c0_1, %c0_2] : memref<128x32xf32, #tpu.memory_space<vmem>>, vector<128x32xf32>
    %cst = arith.constant dense<0.000000e+00> : vector<16x32xf32>
    %2 = tpu.matmul %0, %1, %cst {dimension_numbers = #tpu.dot_dimension_numbers<[1], [0], [0], [1], [0, 0, 1, 1], [], []>} : vector<16x128xf32>, vector<128x32xf32>, vector<16x32xf32> -> vector<16x32xf32>
    %c0_3 = arith.constant 0 : index
    %c0_4 = arith.constant 0 : index
    %3 = vector.load %arg3[%c0_3, %c0_4] : memref<1x32xf32, #tpu.memory_space<vmem>>, vector<1x32xf32>
    %4 = vector.broadcast %3 : vector<1x32xf32> to vector<16x32xf32>
    %5 = arith.addf %2, %4 : vector<16x32xf32>
    %cst_5 = arith.constant 5.000000e-01 : f32
    %6 = vector.broadcast %cst_5 : f32 to vector<16x32xf32>
    %7 = arith.mulf %6, %5 : vector<16x32xf32>
    %cst_6 = arith.constant 0.707106769 : f32
    %8 = vector.broadcast %cst_6 : f32 to vector<16x32xf32>
    %9 = arith.mulf %5, %8 : vector<16x32xf32>
    %10 = math.absf %9 : vector<16x32xf32>
    %cst_7 = arith.constant 0.327591091 : f32
    %11 = vector.broadcast %cst_7 : f32 to vector<16x32xf32>
    %12 = arith.mulf %11, %10 : vector<16x32xf32>
    %cst_8 = arith.constant 1.000000e+00 : f32
    %13 = vector.broadcast %cst_8 : f32 to vector<16x32xf32>
    %14 = arith.addf %13, %12 : vector<16x32xf32>
    %15 = tpu.reciprocal %14 {approx = true} : vector<16x32xf32> -> vector<16x32xf32>
    %16 = arith.mulf %14, %15 : vector<16x32xf32>
    %cst_9 = arith.constant 2.000000e+00 : f32
    %17 = vector.broadcast %cst_9 : f32 to vector<16x32xf32>
    %18 = arith.subf %17, %16 : vector<16x32xf32>
    %19 = arith.mulf %15, %18 : vector<16x32xf32>
    %cst_10 = arith.constant 1.06140542 : f32
    %20 = vector.broadcast %cst_10 : f32 to vector<16x32xf32>
    %21 = arith.mulf %20, %19 : vector<16x32xf32>
    %cst_11 = arith.constant -1.45315206 : f32
    %22 = vector.broadcast %cst_11 : f32 to vector<16x32xf32>
    %23 = arith.addf %21, %22 : vector<16x32xf32>
    %24 = arith.mulf %23, %19 : vector<16x32xf32>
    %cst_12 = arith.constant 1.42141378 : f32
    %25 = vector.broadcast %cst_12 : f32 to vector<16x32xf32>
    %26 = arith.addf %24, %25 : vector<16x32xf32>
    %27 = arith.mulf %26, %19 : vector<16x32xf32>
    %cst_13 = arith.constant -0.284496725 : f32
    %28 = vector.broadcast %cst_13 : f32 to vector<16x32xf32>
    %29 = arith.addf %27, %28 : vector<16x32xf32>
    %30 = arith.mulf %29, %19 : vector<16x32xf32>
    %cst_14 = arith.constant 0.254829586 : f32
    %31 = vector.broadcast %cst_14 : f32 to vector<16x32xf32>
    %32 = arith.addf %30, %31 : vector<16x32xf32>
    %33 = arith.mulf %32, %19 : vector<16x32xf32>
    %cst_15 = arith.constant 0.000000e+00 : f32
    %34 = vector.broadcast %cst_15 : f32 to vector<16x32xf32>
    %35 = arith.subf %34, %10 : vector<16x32xf32>
    %36 = arith.mulf %35, %10 : vector<16x32xf32>
    %37 = math.exp %36 : vector<16x32xf32>
    %38 = arith.mulf %33, %37 : vector<16x32xf32>
    %cst_16 = arith.constant 1.000000e+00 : f32
    %39 = vector.broadcast %cst_16 : f32 to vector<16x32xf32>
    %40 = arith.subf %39, %38 : vector<16x32xf32>
    %cst_17 = arith.constant 0.000000e+00 : f32
    %41 = vector.broadcast %cst_17 : f32 to vector<16x32xf32>
    %42 = arith.cmpf olt, %9, %41 : vector<16x32xf32>
    %cst_18 = arith.constant 0.000000e+00 : f32
    %43 = vector.broadcast %cst_18 : f32 to vector<16x32xf32>
    %44 = arith.subf %43, %40 : vector<16x32xf32>
    %45 = arith.select %42, %44, %40 : vector<16x32xi1>, vector<16x32xf32>
    %cst_19 = arith.constant 1.000000e+00 : f32
    %46 = vector.broadcast %cst_19 : f32 to vector<16x32xf32>
    %47 = arith.addf %46, %45 : vector<16x32xf32>
    %48 = arith.mulf %7, %47 : vector<16x32xf32>
    %c0_20 = arith.constant 0 : index
    %c0_21 = arith.constant 0 : index
    %49 = vector.load %arg4[%c0_20, %c0_21] : memref<32x128xf32, #tpu.memory_space<vmem>>, vector<32x128xf32>
    %cst_22 = arith.constant dense<0.000000e+00> : vector<16x128xf32>
    %50 = tpu.matmul %48, %49, %cst_22 {dimension_numbers = #tpu.dot_dimension_numbers<[1], [0], [0], [1], [0, 0, 1, 1], [], []>} : vector<16x32xf32>, vector<32x128xf32>, vector<16x128xf32> -> vector<16x128xf32>
    %c0_23 = arith.constant 0 : index
    %c0_24 = arith.constant 0 : index
    %51 = vector.load %arg5[%c0_23, %c0_24] : memref<1x128xf32, #tpu.memory_space<vmem>>, vector<1x128xf32>
    %52 = vector.broadcast %51 : vector<1x128xf32> to vector<16x128xf32>
    %53 = arith.addf %50, %52 : vector<16x128xf32>
    %cst_25 = arith.constant 5.000000e-01 : f32
    %54 = vector.broadcast %cst_25 : f32 to vector<16x128xf32>
    %55 = arith.mulf %54, %53 : vector<16x128xf32>
    %cst_26 = arith.constant 0.707106769 : f32
    %56 = vector.broadcast %cst_26 : f32 to vector<16x128xf32>
    %57 = arith.mulf %53, %56 : vector<16x128xf32>
    %58 = math.absf %57 : vector<16x128xf32>
    %cst_27 = arith.constant 0.327591091 : f32
    %59 = vector.broadcast %cst_27 : f32 to vector<16x128xf32>
    %60 = arith.mulf %59, %58 : vector<16x128xf32>
    %cst_28 = arith.constant 1.000000e+00 : f32
    %61 = vector.broadcast %cst_28 : f32 to vector<16x128xf32>
    %62 = arith.addf %61, %60 : vector<16x128xf32>
    %63 = tpu.reciprocal %62 {approx = true} : vector<16x128xf32> -> vector<16x128xf32>
    %64 = arith.mulf %62, %63 : vector<16x128xf32>
    %cst_29 = arith.constant 2.000000e+00 : f32
    %65 = vector.broadcast %cst_29 : f32 to vector<16x128xf32>
    %66 = arith.subf %65, %64 : vector<16x128xf32>
    %67 = arith.mulf %63, %66 : vector<16x128xf32>
    %cst_30 = arith.constant 1.06140542 : f32
    %68 = vector.broadcast %cst_30 : f32 to vector<16x128xf32>
    %69 = arith.mulf %68, %67 : vector<16x128xf32>
    %cst_31 = arith.constant -1.45315206 : f32
    %70 = vector.broadcast %cst_31 : f32 to vector<16x128xf32>
    %71 = arith.addf %69, %70 : vector<16x128xf32>
    %72 = arith.mulf %71, %67 : vector<16x128xf32>
    %cst_32 = arith.constant 1.42141378 : f32
    %73 = vector.broadcast %cst_32 : f32 to vector<16x128xf32>
    %74 = arith.addf %72, %73 : vector<16x128xf32>
    %75 = arith.mulf %74, %67 : vector<16x128xf32>
    %cst_33 = arith.constant -0.284496725 : f32
    %76 = vector.broadcast %cst_33 : f32 to vector<16x128xf32>
    %77 = arith.addf %75, %76 : vector<16x128xf32>
    %78 = arith.mulf %77, %67 : vector<16x128xf32>
    %cst_34 = arith.constant 0.254829586 : f32
    %79 = vector.broadcast %cst_34 : f32 to vector<16x128xf32>
    %80 = arith.addf %78, %79 : vector<16x128xf32>
    %81 = arith.mulf %80, %67 : vector<16x128xf32>
    %cst_35 = arith.constant 0.000000e+00 : f32
    %82 = vector.broadcast %cst_35 : f32 to vector<16x128xf32>
    %83 = arith.subf %82, %58 : vector<16x128xf32>
    %84 = arith.mulf %83, %58 : vector<16x128xf32>
    %85 = math.exp %84 : vector<16x128xf32>
    %86 = arith.mulf %81, %85 : vector<16x128xf32>
    %cst_36 = arith.constant 1.000000e+00 : f32
    %87 = vector.broadcast %cst_36 : f32 to vector<16x128xf32>
    %88 = arith.subf %87, %86 : vector<16x128xf32>
    %cst_37 = arith.constant 0.000000e+00 : f32
    %89 = vector.broadcast %cst_37 : f32 to vector<16x128xf32>
    %90 = arith.cmpf olt, %57, %89 : vector<16x128xf32>
    %cst_38 = arith.constant 0.000000e+00 : f32
    %91 = vector.broadcast %cst_38 : f32 to vector<16x128xf32>
    %92 = arith.subf %91, %88 : vector<16x128xf32>
    %93 = arith.select %90, %92, %88 : vector<16x128xi1>, vector<16x128xf32>
    %cst_39 = arith.constant 1.000000e+00 : f32
    %94 = vector.broadcast %cst_39 : f32 to vector<16x128xf32>
    %95 = arith.addf %94, %93 : vector<16x128xf32>
    %96 = arith.mulf %55, %95 : vector<16x128xf32>
    %97 = arith.addf %0, %96 : vector<16x128xf32>
    %c0_40 = arith.constant 0 : index
    %c0_41 = arith.constant 0 : index
    %98 = vector.load %arg6[%c0_40, %c0_41] : memref<16x128xf32, #tpu.memory_space<vmem>>, vector<16x128xf32>
    tpu.vector_store %arg6[%c0_40, %c0_41], %97 {strides = array<i32>} : memref<16x128xf32, #tpu.memory_space<vmem>>, vector<16x128xf32>,
    return
  }
  func.func @transform_0(%arg0: i32) -> (i32, i32) {
    %c0_i32 = arith.constant 0 : i32
    %c0_i32_0 = arith.constant 0 : i32
    return %arg0, %c0_i32 : i32, i32
  }
  func.func @transform_1(%arg0: i32) -> (i32, i32) {
    %c0_i32 = arith.constant 0 : i32
    %c0_i32_0 = arith.constant 0 : i32
    %c0_i32_1 = arith.constant 0 : i32
    return %c0_i32, %c0_i32_0 : i32, i32
  }
  func.func @transform_2(%arg0: i32) -> (i32, i32) {
    %c0_i32 = arith.constant 0 : i32
    %c0_i32_0 = arith.constant 0 : i32
    %c0_i32_1 = arith.constant 0 : i32
    return %c0_i32, %c0_i32_0 : i32, i32
  }
  func.func @transform_3(%arg0: i32) -> (i32, i32) {
    %c0_i32 = arith.constant 0 : i32
    %c0_i32_0 = arith.constant 0 : i32
    %c0_i32_1 = arith.constant 0 : i32
    return %c0_i32, %c0_i32_0 : i32, i32
  }
  func.func @transform_4(%arg0: i32) -> (i32, i32) {
    %c0_i32 = arith.constant 0 : i32
    %c0_i32_0 = arith.constant 0 : i32
    %c0_i32_1 = arith.constant 0 : i32
    return %c0_i32, %c0_i32_0 : i32, i32
  }
  func.func @transform_5(%arg0: i32) -> (i32, i32) {
    %c0_i32 = arith.constant 0 : i32
    %c0_i32_0 = arith.constant 0 : i32
    return %arg0, %c0_i32 : i32, i32
  }
}

</mosaic_0001>

<llo_original>
// kernel: tpu_custom_call.1
$region0: #{tpu_custom_call.1}
  #allocation0 [shape = 'u32[]', space=smem, size = 0x4, offset = 0x4, fixed_abs, tag = 'smem constant byte address 0x4 - core index']
  #allocation1 [shape = 'u32[144,128]{1,0:T(1,128)}', space=vmem, size = 0x12000, scoped, tag = 'internal scratch']
  %s0 = inlined_call_operand.vmem [shape: f32[16,128], index: 0, kind: input, shape index: {}]
  %s1 = inlined_call_operand.vmem [shape: f32[128,32], index: 1, kind: input, shape index: {}]
  %s2 = inlined_call_operand.vmem [shape: f32[1,32], index: 2, kind: input, shape index: {}]
  %s3 = inlined_call_operand.vmem [shape: f32[32,128], index: 3, kind: input, shape index: {}]
  %s4 = inlined_call_operand.vmem [shape: f32[1,128], index: 4, kind: input, shape index: {}]
  %s5 = inlined_call_operand.hbm [shape: f32[16,128], index: 5, kind: output, shape index: {}]
  %s6 = sld [smem:[#allocation0]]
  $region30: #{tpu_custom_call.1} parent=0
    _
  %s8 = ssub.s32 1, %s6
  %s9 = scalar_select 0, %s8, %s6
  $region1: #{tpu_custom_call.1} parent=0
    #allocation2 [shape = 'u8[8192]{0}', space=vmem, size = 0x2000, scoped, tag = 'output window, operand 0, single buffered']
    #allocation3 [shape = 's32[1]{0}', space=sflag, size = 0x4, scoped, tag = 'scoped memory for tpu_custom_call.1']
    %10 = vsyncpa [#allocation3], 0
    // Predicated region
    $region2: #{tpu_custom_call.1} parent=1 // pred_check
      _
    $region3: #{tpu_custom_call.1} parent=1 // pred_check_branch
      %12 = sbr.rel (0) target = $region5
    $region4: #{tpu_custom_call.1} parent=1 // pred_region
      _
    $region5: #{tpu_custom_call.1} parent=1 // pred_fallthru
      _
    // Predicated region
    $region6: #{tpu_custom_call.1} parent=1 // pred_check
      _
    $region7: #{tpu_custom_call.1} parent=1 // pred_check_branch
      %14 = sbr.rel (0) target = $region9
    $region8: #{tpu_custom_call.1} parent=1 // pred_region
      _
    $region9: #{tpu_custom_call.1} parent=1 // pred_fallthru
      _
    // Predicated region
    $region10: #{tpu_custom_call.1} parent=1 // pred_check
      _
    $region11: #{tpu_custom_call.1} parent=1 // pred_check_branch
      %16 = sbr.rel (0) target = $region13
    $region12: #{tpu_custom_call.1} parent=1 // pred_region
      _
    $region13: #{tpu_custom_call.1} parent=1 // pred_fallthru
      _
    // Predicated region
    $region14: #{tpu_custom_call.1} parent=1 // pred_check
      _
    $region15: #{tpu_custom_call.1} parent=1 // pred_check_branch
      %18 = sbr.rel (0) target = $region17
    $region16: #{tpu_custom_call.1} parent=1 // pred_region
      _
    $region17: #{tpu_custom_call.1} parent=1 // pred_fallthru
      _
    // Predicated region
    $region18: #{tpu_custom_call.1} parent=1 // pred_check
      _
    $region19: #{tpu_custom_call.1} parent=1 // pred_check_branch
      %20 = sbr.rel (0) target = $region21
    $region20: #{tpu_custom_call.1} parent=1 // pred_region
      _
    $region21: #{tpu_custom_call.1} parent=1 // pred_fallthru
      _
    %v21 = vld [vmem:[%s0] sm:$0xff]
    %v22 = vld [vmem:[%s0 + $0x8] sm:$0xff]
    %v23 = vld [vmem:[%s1] sm:$0xff]
    %v24 = vld [vmem:[%s1 + $0x8] sm:$0xff]
    %v25 = vld [vmem:[%s1 + $0x10] sm:$0xff]
    %v26 = vld [vmem:[%s1 + $0x18] sm:$0xff]
    %v27 = vld [vmem:[%s1 + $0x20] sm:$0xff]
    %v28 = vld [vmem:[%s1 + $0x28] sm:$0xff]
    %v29 = vld [vmem:[%s1 + $0x30] sm:$0xff]
    %v30 = vld [vmem:[%s1 + $0x38] sm:$0xff]
    %v31 = vld [vmem:[%s1 + $0x40] sm:$0xff]
    %v32 = vld [vmem:[%s1 + $0x48] sm:$0xff]
    %v33 = vld [vmem:[%s1 + $0x50] sm:$0xff]
    %v34 = vld [vmem:[%s1 + $0x58] sm:$0xff]
    %v35 = vld [vmem:[%s1 + $0x60] sm:$0xff]
    %v36 = vld [vmem:[%s1 + $0x68] sm:$0xff]
    %v37 = vld [vmem:[%s1 + $0x70] sm:$0xff]
    %v38 = vld [vmem:[%s1 + $0x78] sm:$0xff]
    %v39 = vld [vmem:[%s2] sm:$0x1]
    %v41 = vlaneseq
    %v42 = vshrl.u32 %v41, 7
    %v43 = vsub.s32 0, %v42
    %v44 = vrot.slane %v39, %v43
    %46 = vmatprep.subr.mxu0 0.0
    %47 = vmatpush1.msra.mxu0 %v23
    %48 = vmatprep.subr.mxu0 0.0
    %49 = vmatpush1.msra.mxu0 %v24
    %50 = vmatprep.subr.mxu0 0.0
    %51 = vmatpush1.msra.mxu0 %v25
    %52 = vmatprep.subr.mxu0 0.0
    %53 = vmatpush1.msra.mxu0 %v26
    %54 = vmatprep.subr.mxu0 0.0
    %55 = vmatpush1.msra.mxu0 %v27
    %56 = vmatprep.subr.mxu0 0.0
    %57 = vmatpush1.msra.mxu0 %v28
    %58 = vmatprep.subr.mxu0 0.0
    %59 = vmatpush1.msra.mxu0 %v29
    %60 = vmatprep.subr.mxu0 0.0
    %61 = vmatpush1.msra.mxu0 %v30
    %62 = vmatprep.subr.mxu0 0.0
    %63 = vmatpush1.msra.mxu0 %v31
    %64 = vmatprep.subr.mxu0 0.0
    %65 = vmatpush1.msra.mxu0 %v32
    %66 = vmatprep.subr.mxu0 0.0
    %67 = vmatpush1.msra.mxu0 %v33
    %68 = vmatprep.subr.mxu0 0.0
    %69 = vmatpush1.msra.mxu0 %v34
    %70 = vmatprep.subr.mxu0 0.0
    %71 = vmatpush1.msra.mxu0 %v35
    %72 = vmatprep.subr.mxu0 0.0
    %73 = vmatpush1.msra.mxu0 %v36
    %74 = vmatprep.subr.mxu0 0.0
    %75 = vmatpush1.msra.mxu0 %v37
    %76 = vmatprep.subr.mxu0 0.0
    %77 = vmatpush1.msra.mxu0 %v38
    %78 = vmatprep.subr.mxu0 0.0
    %79 = vmatpush1.msra.mxu0 0.0
    %80 = vmatprep.subr.mxu0 0.0
    %81 = vmatpush1.msra.mxu0 0.0
    %82 = vmatprep.subr.mxu0 0.0
    %83 = vmatpush1.msra.mxu0 0.0
    %84 = vmatprep.subr.mxu0 0.0
    %85 = vmatpush1.msra.mxu0 0.0
    %86 = vmatprep.subr.mxu0 0.0
    %87 = vmatpush1.msra.mxu0 0.0
    %88 = vmatprep.subr.mxu0 0.0
    %89 = vmatpush1.msra.mxu0 0.0
    %90 = vmatprep.subr.mxu0 0.0
    %91 = vmatpush1.msra.mxu0 0.0
    %92 = vmatprep.subr.mxu0 0.0
    %93 = vmatpush1.msra.mxu0 0.0
    %94 = vmatprep.subr.mxu0 0.0
    %95 = vmatpush1.msra.mxu0 0.0
    %96 = vmatprep.subr.mxu0 0.0
    %97 = vmatpush1.msra.mxu0 0.0
    %98 = vmatprep.subr.mxu0 0.0
    %99 = vmatpush1.msra.mxu0 0.0
    %100 = vmatprep.subr.mxu0 0.0
    %101 = vmatpush1.msra.mxu0 0.0
    %102 = vmatprep.subr.mxu0 0.0
    %103 = vmatpush1.msra.mxu0 0.0
    %104 = vmatprep.subr.mxu0 0.0
    %105 = vmatpush1.msra.mxu0 0.0
    %106 = vmatprep.subr.mxu0 0.0
    %107 = vmatpush1.msra.mxu0 0.0
    %108 = vmatprep.subr.mxu0 0.0
    %109 = vmatpush1.msra.mxu0 0.0
    %110 = vmatprep.mubr.f32.mxu0 0.0
    %111 = vmatmul.mubr.f32.gmra.mrb[0].mxu0 %v21
    %v112 = vpop.f32.mrb[0].mxu0
    %v113 = vadd.f32 %v44, %v112
    %v114 = vpop.f32.mrb[0].mxu0
    %115 = vmatprep.mubr.f32.mxu0 0.0
    %116 = vmatmul.mubr.f32.gmra.mrb[0].mxu0 %v22
    %v117 = vpop.f32.mrb[0].mxu0
    %v118 = vadd.f32 %v44, %v117
    %v119 = vpop.f32.mrb[0].mxu0
    %120 = vdwg.mxu0
    %v121 = vmul.f32 %v113, 0.5
    %v122 = vmul.f32 %v118, 0.5
    %v123 = vmul.f32 %v113, 0.70710677
    %v124 = vmul.f32 %v118, 0.70710677
    %v125 = vand.u32 2147483647, %v123
    %v126 = vand.u32 2147483647, %v124
    %v127 = vmul.f32 %v125, 0.3275911
    %v128 = vmul.f32 %v126, 0.3275911
    %v129 = vadd.f32 %v127, 1.0
    %v130 = vadd.f32 %v128, 1.0
    %v131 = vrcp.pop %v129
    %v132 = vrcp.pop %v130
    %v133 = vmul.f32 %v129, %v131
    %v134 = vmul.f32 %v130, %v132
    %v135 = vsub.f32 2.0, %v133
    %v136 = vsub.f32 2.0, %v134
    %v137 = vmul.f32 %v131, %v135
    %v138 = vmul.f32 %v132, %v136
    %v139 = vmul.f32 %v137, 1.0614054
    %v140 = vmul.f32 %v138, 1.0614054
    %v141 = vadd.f32 %v139, -1.4531521
    %v142 = vadd.f32 %v140, -1.4531521
    %v143 = vmul.f32 %v141, %v137
    %v144 = vmul.f32 %v142, %v138
    %v145 = vadd.f32 %v143, 1.4214138
    %v146 = vadd.f32 %v144, 1.4214138
    %v147 = vmul.f32 %v145, %v137
    %v148 = vmul.f32 %v146, %v138
    %v149 = vadd.f32 %v147, -0.28449672
    %v150 = vadd.f32 %v148, -0.28449672
    %v151 = vmul.f32 %v149, %v137
    %v152 = vmul.f32 %v150, %v138
    %v153 = vadd.f32 %v151, 0.2548296
    %v154 = vadd.f32 %v152, 0.2548296
    %v155 = vmul.f32 %v153, %v137
    %v156 = vmul.f32 %v154, %v138
    %v157 = vsub.f32 0.0, %v125
    %v158 = vsub.f32 0.0, %v126
    %v159 = vmul.f32 %v157, %v125
    %v160 = vmul.f32 %v158, %v126
    %v161 = vmul.f32 %v159, 1.442695
    %v162 = vpow.pop %v161
    %v163 = vmul.f32 %v160, 1.442695
    %v164 = vpow.pop %v163
    %v165 = vmul.f32 %v155, %v162
    %v166 = vmul.f32 %v156, %v164
    %v167 = vsub.f32 1.0, %v165
    %v168 = vsub.f32 1.0, %v166
    %vm169 = vcmp.lt.f32.partialorder %v123, 0.0
    %vm170 = vcmp.lt.f32.partialorder %v124, 0.0
    %v171 = vsub.f32 0.0, %v167
    %v172 = vsub.f32 0.0, %v168
    %v173 = vsel %vm169, %v171, %v167
    %v174 = vsel %vm170, %v172, %v168
    %v175 = vadd.f32 %v173, 1.0
    %v176 = vadd.f32 %v174, 1.0
    %v177 = vmul.f32 %v121, %v175
    %v178 = vmul.f32 %v122, %v176
    %v179 = vld [vmem:[%s3] sm:$0xff]
    %v180 = vld [vmem:[%s3 + $0x8] sm:$0xff]
    %v181 = vld [vmem:[%s3 + $0x10] sm:$0xff]
    %v182 = vld [vmem:[%s3 + $0x18] sm:$0xff]
    %v183 = vld [vmem:[%s4] sm:$0x1]
    %v185 = vlaneseq
    %v186 = vshrl.u32 %v185, 7
    %v187 = vsub.s32 0, %v186
    %v188 = vrot.slane %v183, %v187
    %vm190 = vcmask 261120
    %v192 = vsel %vm190, %v177, 0
    %v195 = vsel %vm190, %v178, 0
    %197 = vmatprep.subr.mxu0 0.0
    %198 = vmatpush1.msra.mxu0 %v179
    %199 = vmatprep.subr.mxu0 0.0
    %200 = vmatpush1.msra.mxu0 %v180
    %201 = vmatprep.subr.mxu0 0.0
    %202 = vmatpush1.msra.mxu0 %v181
    %203 = vmatprep.subr.mxu0 0.0
    %204 = vmatpush1.msra.mxu0 %v182
    %205 = vmatprep.subr.mxu0 0.0
    %206 = vmatpush1.msra.mxu0 0.0
    %207 = vmatprep.subr.mxu0 0.0
    %208 = vmatpush1.msra.mxu0 0.0
    %209 = vmatprep.subr.mxu0 0.0
    %210 = vmatpush1.msra.mxu0 0.0
    %211 = vmatprep.subr.mxu0 0.0
    %212 = vmatpush1.msra.mxu0 0.0
    %213 = vmatprep.subr.mxu0 0.0
    %214 = vmatpush1.msra.mxu0 0.0
    %215 = vmatprep.subr.mxu0 0.0
    %216 = vmatpush1.msra.mxu0 0.0
    %217 = vmatprep.subr.mxu0 0.0
    %218 = vmatpush1.msra.mxu0 0.0
    %219 = vmatprep.subr.mxu0 0.0
    %220 = vmatpush1.msra.mxu0 0.0
    %221 = vmatprep.subr.mxu0 0.0
    %222 = vmatpush1.msra.mxu0 0.0
    %223 = vmatprep.subr.mxu0 0.0
    %224 = vmatpush1.msra.mxu0 0.0
    %225 = vmatprep.subr.mxu0 0.0
    %226 = vmatpush1.msra.mxu0 0.0
    %227 = vmatprep.subr.mxu0 0.0
    %228 = vmatpush1.msra.mxu0 0.0
    %229 = vmatprep.subr.mxu0 0.0
    %230 = vmatpush1.msra.mxu0 0.0
    %231 = vmatprep.subr.mxu0 0.0
    %232 = vmatpush1.msra.mxu0 0.0
    %233 = vmatprep.subr.mxu0 0.0
    %234 = vmatpush1.msra.mxu0 0.0
    %235 = vmatprep.subr.mxu0 0.0
    %236 = vmatpush1.msra.mxu0 0.0
    %237 = vmatprep.subr.mxu0 0.0
    %238 = vmatpush1.msra.mxu0 0.0
    %239 = vmatprep.subr.mxu0 0.0
    %240 = vmatpush1.msra.mxu0 0.0
    %241 = vmatprep.subr.mxu0 0.0
    %242 = vmatpush1.msra.mxu0 0.0
    %243 = vmatprep.subr.mxu0 0.0
    %244 = vmatpush1.msra.mxu0 0.0
    %245 = vmatprep.subr.mxu0 0.0
    %246 = vmatpush1.msra.mxu0 0.0
    %247 = vmatprep.subr.mxu0 0.0
    %248 = vmatpush1.msra.mxu0 0.0
    %249 = vmatprep.subr.mxu0 0.0
    %250 = vmatpush1.msra.mxu0 0.0
    %251 = vmatprep.subr.mxu0 0.0
    %252 = vmatpush1.msra.mxu0 0.0
    %253 = vmatprep.subr.mxu0 0.0
    %254 = vmatpush1.msra.mxu0 0.0
    %255 = vmatprep.subr.mxu0 0.0
    %256 = vmatpush1.msra.mxu0 0.0
    %257 = vmatprep.subr.mxu0 0.0
    %258 = vmatpush1.msra.mxu0 0.0
    %259 = vmatprep.subr.mxu0 0.0
    %260 = vmatpush1.msra.mxu0 0.0
    %261 = vmatprep.mubr.f32.mxu0 0.0
    %262 = vmatmul.mubr.f32.gmra.mrb[0].mxu0 %v192
    %v263 = vpop.f32.mrb[0].mxu0
    %v264 = vadd.f32 %v188, %v263
    %v265 = vpop.f32.mrb[0].mxu0
    %266 = vmatprep.mubr.f32.mxu0 0.0
    %267 = vmatmul.mubr.f32.gmra.mrb[0].mxu0 %v195
    %v268 = vpop.f32.mrb[0].mxu0
    %v269 = vadd.f32 %v188, %v268
    %v270 = vpop.f32.mrb[0].mxu0
    %271 = vdwg.mxu0
    %v272 = vmul.f32 %v264, 0.5
    %v273 = vmul.f32 %v269, 0.5
    %v274 = vmul.f32 %v264, 0.70710677
    %v275 = vmul.f32 %v269, 0.70710677
    %v276 = vand.u32 2147483647, %v274
    %v277 = vand.u32 2147483647, %v275
    %v278 = vmul.f32 %v276, 0.3275911
    %v279 = vmul.f32 %v277, 0.3275911
    %v280 = vadd.f32 %v278, 1.0
    %v281 = vadd.f32 %v279, 1.0
    %v282 = vrcp.pop %v280
    %v283 = vrcp.pop %v281
    %v284 = vmul.f32 %v280, %v282
    %v285 = vmul.f32 %v281, %v283
    %v286 = vsub.f32 2.0, %v284
    %v287 = vsub.f32 2.0, %v285
    %v288 = vmul.f32 %v282, %v286
    %v289 = vmul.f32 %v283, %v287
    %v290 = vmul.f32 %v288, 1.0614054
    %v291 = vmul.f32 %v289, 1.0614054
    %v292 = vadd.f32 %v290, -1.4531521
    %v293 = vadd.f32 %v291, -1.4531521
    %v294 = vmul.f32 %v292, %v288
    %v295 = vmul.f32 %v293, %v289
    %v296 = vadd.f32 %v294, 1.4214138
    %v297 = vadd.f32 %v295, 1.4214138
    %v298 = vmul.f32 %v296, %v288
    %v299 = vmul.f32 %v297, %v289
    %v300 = vadd.f32 %v298, -0.28449672
    %v301 = vadd.f32 %v299, -0.28449672
    %v302 = vmul.f32 %v300, %v288
    %v303 = vmul.f32 %v301, %v289
    %v304 = vadd.f32 %v302, 0.2548296
    %v305 = vadd.f32 %v303, 0.2548296
    %v306 = vmul.f32 %v304, %v288
    %v307 = vmul.f32 %v305, %v289
    %v308 = vsub.f32 0.0, %v276
    %v309 = vsub.f32 0.0, %v277
    %v310 = vmul.f32 %v308, %v276
    %v311 = vmul.f32 %v309, %v277
    %v312 = vmul.f32 %v310, 1.442695
    %v313 = vpow.pop %v312
    %v314 = vmul.f32 %v311, 1.442695
    %v315 = vpow.pop %v314
    %v316 = vmul.f32 %v306, %v313
    %v317 = vmul.f32 %v307, %v315
    %v318 = vsub.f32 1.0, %v316
    %v319 = vsub.f32 1.0, %v317
    %vm320 = vcmp.lt.f32.partialorder %v274, 0.0
    %vm321 = vcmp.lt.f32.partialorder %v275, 0.0
    %v322 = vsub.f32 0.0, %v318
    %v323 = vsub.f32 0.0, %v319
    %v324 = vsel %vm320, %v322, %v318
    %v325 = vsel %vm321, %v323, %v319
    %v326 = vadd.f32 %v324, 1.0
    %v327 = vadd.f32 %v325, 1.0
    %v328 = vmul.f32 %v272, %v326
    %v329 = vmul.f32 %v273, %v327
    %v330 = vadd.f32 %v21, %v328
    %v331 = vadd.f32 %v22, %v329
    %332 = vst [vmem:[#allocation2] sm:$0xff] %v330
    %333 = vst [vmem:[#allocation2 + $0x8] sm:$0xff] %v331
    // Predicated region
    $region22: #{tpu_custom_call.1} parent=1 // pred_check
      _
    $region23: #{tpu_custom_call.1} parent=1 // pred_check_branch
      %335 = sbr.rel (0) target = $region25
    $region24: #{tpu_custom_call.1} parent=1 // pred_region
      %s337 = ssub.s32 256, 256
      %338 = vsyncadd [#allocation3], %s337
      %s339 = sshll.u32 [#allocation2], 4
      %s340 = int_to_ptr.vmem [resolvable:$true] %s339
      %345 = dma.vmem_to_hbm [thread:$0]  %s340, 256, %s5, [#allocation3], 128, 128, 8
    $region25: #{tpu_custom_call.1} parent=1 // pred_fallthru
      _
    // Predicated region
    $region26: #{tpu_custom_call.1} parent=1 // pred_check
      _
    $region27: #{tpu_custom_call.1} parent=1 // pred_check_branch
      %347 = sbr.rel (0) target = $region29
    $region28: #{tpu_custom_call.1} parent=1 // pred_region
      %348 = dma.done [#allocation3], 256
    $region29: #{tpu_custom_call.1} parent=1 // pred_fallthru
      _
    %349 = vsyncpa [#allocation3], 1

</llo_original>
